<compile_context>
chip_gen: v7x
topology: tpu7x:2x2x1
jax: 0.10.0
libtpu: 0.0.40
codegen_flags: <defaults>
</compile_context>

<pallas_src>
import functools
import math

import numpy as np
import jax
import jax.numpy as jnp
from jax.experimental import pallas as pl
from jax.experimental.pallas import tpu as pltpu


# ----------------------------------------------------------------------------
# Host-side parameter construction (window, DFT matrices, mel filterbank).
# ----------------------------------------------------------------------------
def _round_up(x, m):
    return (x + m - 1) // m * m


def _hann_window(n_fft):
    # torch.hann_window(n_fft, periodic=True)
    n = np.arange(n_fft, dtype=np.float64)
    return 0.5 - 0.5 * np.cos(2.0 * np.pi * n / n_fft)


def _dft_matrices(n_fft, n_freqs):
    # Real / imag parts of the one-sided DFT: exp(-2*pi*i*n*f/N)
    n = np.arange(n_fft, dtype=np.float64)[:, None]
    f = np.arange(n_freqs, dtype=np.float64)[None, :]
    ang = 2.0 * np.pi * n * f / n_fft
    return np.cos(ang), -np.sin(ang)


def _mel_filterbank(n_freqs, f_min, f_max, n_mels, sr):
    # torchaudio.functional.melscale_fbanks, mel_scale="htk", norm=None
    all_freqs = np.linspace(0.0, sr // 2, n_freqs)

    def hz_to_mel(f):
        return 2595.0 * np.log10(1.0 + f / 700.0)

    def mel_to_hz(m):
        return 700.0 * (10.0 ** (m / 2595.0) - 1.0)

    m_pts = np.linspace(hz_to_mel(f_min), hz_to_mel(f_max), n_mels + 2)
    f_pts = mel_to_hz(m_pts)
    f_diff = f_pts[1:] - f_pts[:-1]                       # (n_mels + 1,)
    slopes = f_pts[None, :] - all_freqs[:, None]          # (n_freqs, n_mels + 2)
    down = -slopes[:, :-2] / f_diff[:-1]
    up = slopes[:, 2:] / f_diff[1:]
    fb = np.maximum(0.0, np.minimum(down, up))            # (n_freqs, n_mels)
    return fb


# ----------------------------------------------------------------------------
# Fused log-mel kernel: one grid step = one batch element.
# ----------------------------------------------------------------------------
def _logmel_kernel(x_ref, wcs_ref, fb_ref, o_ref, *,
                   n_frames, blocks_per_frame, hop, f_pad):
    # x_ref   : (1, n_blocks, hop)      hop-sized blocks of the padded waveform
    # wcs_ref : (n_fft, 2 * f_pad)      window * [cos | -sin] DFT matrix
    # fb_ref  : (f_pad, n_mels_pad)     zero-padded mel filterbank
    # o_ref   : (1, n_frames, n_mels_pad)
    acc = jnp.zeros((n_frames, 2 * f_pad), jnp.float32)
    # Frame t = blocks [t, t + blocks_per_frame); fold each hop-sized tap into
    # a K=hop MXU matmul (static slices, fully unrolled tiny loop).
    for r in range(blocks_per_frame):
        blk = x_ref[0, r:r + n_frames, :]                     # (T, hop)
        acc = acc + jnp.dot(blk, wcs_ref[r * hop:(r + 1) * hop, :],
                            preferred_element_type=jnp.float32)
    re = acc[:, :f_pad]
    im = acc[:, f_pad:]
    power = re * re + im * im                                 # (T, f_pad)
    mel = jnp.dot(power, fb_ref[...],
                  preferred_element_type=jnp.float32)         # (T, n_mels_pad)
    # AmplitudeToDB (stype="power", top_db=None, ref=1.0):
    o_ref[0] = 10.0 * jnp.log10(jnp.maximum(mel, 1e-10))


# ----------------------------------------------------------------------------
# Module factory (precomputes constants once) + forward.
# ----------------------------------------------------------------------------
def make_audio2logmel(sr, n_fft, hop_length, n_mels=128, f_min=0.0, f_max=None):
    assert n_fft % hop_length == 0, "this kernel assumes hop_length | n_fft"
    f_max = float(sr) / 2.0 if f_max is None else float(f_max)
    n_freqs = n_fft // 2 + 1
    f_pad = _round_up(n_freqs, 128)          # lane-dense frequency axis
    m_pad = _round_up(n_mels, 128)           # lane-dense mel axis
    hop = hop_length
    blocks_per_frame = n_fft // hop

    w = _hann_window(n_fft)
    cos_m, msin_m = _dft_matrices(n_fft, n_freqs)
    wcs_np = np.zeros((n_fft, 2 * f_pad), np.float64)
    wcs_np[:, :n_freqs] = w[:, None] * cos_m
    wcs_np[:, f_pad:f_pad + n_freqs] = w[:, None] * msin_m
    fb_np = np.zeros((f_pad, m_pad), np.float64)
    fb_np[:n_freqs, :n_mels] = _mel_filterbank(n_freqs, f_min, f_max, n_mels, sr)

    wcs = jnp.asarray(wcs_np, jnp.float32)
    fb = jnp.asarray(fb_np, jnp.float32)

    def forward(x):
        # x: (B, L) waveform -> (B, n_mels, n_frames) log-mel spectrogram
        x = jnp.asarray(x, jnp.float32)
        B, L = x.shape
        pad = n_fft // 2
        xp = jnp.pad(x, ((0, 0), (pad, pad)), mode="reflect")   # center=True
        n_frames = 1 + L // hop
        total = _round_up(L + 2 * pad, hop)
        if total > L + 2 * pad:
            xp = jnp.pad(xp, ((0, 0), (0, total - (L + 2 * pad))))
        n_blocks = total // hop
        xb = xp.reshape(B, n_blocks, hop)

        kernel = functools.partial(
            _logmel_kernel, n_frames=n_frames,
            blocks_per_frame=blocks_per_frame, hop=hop, f_pad=f_pad)

        out = pl.pallas_call(
            kernel,
            out_shape=jax.ShapeDtypeStruct((B, n_frames, m_pad), jnp.float32),
            grid=(B,),
            in_specs=[
                pl.BlockSpec((1, n_blocks, hop), lambda b: (b, 0, 0)),
                pl.BlockSpec((n_fft, 2 * f_pad), lambda b: (0, 0)),
                pl.BlockSpec((f_pad, m_pad), lambda b: (0, 0)),
            ],
            out_specs=pl.BlockSpec((1, n_frames, m_pad), lambda b: (b, 0, 0)),
            compiler_params=pltpu.CompilerParams(
                dimension_semantics=("parallel",)),
        )(xb, wcs, fb)

        # Lane-dense (T, n_mels) is computed in-kernel; present torchaudio's
        # (B, n_mels, T) layout via a cheap wrapper transpose.
        return jnp.transpose(out[:, :, :n_mels], (0, 2, 1))

    return forward


# ----------------------------------------------------------------------------
# Pure-JAX reference (explicit framing) for a sanity check.
# ----------------------------------------------------------------------------
def _reference_logmel(x, sr, n_fft, hop, n_mels):
    x = jnp.asarray(x, jnp.float32)
    pad = n_fft // 2
    xp = jnp.pad(x, ((0, 0), (pad, pad)), mode="reflect")
    T = 1 + x.shape[1] // hop
    frames = jnp.stack([xp[:, t * hop:t * hop + n_fft] for t in range(T)],
                       axis=1)                                     # (B, T, n_fft)
    w = jnp.asarray(_hann_window(n_fft), jnp.float32)
    frames = frames * w
    n_freqs = n_fft // 2 + 1
    c_np, s_np = _dft_matrices(n_fft, n_freqs)
    c = jnp.asarray(c_np, jnp.float32)
    s = jnp.asarray(s_np, jnp.float32)
    hi = jax.lax.Precision.HIGHEST
    re = jnp.matmul(frames, c, precision=hi)
    im = jnp.matmul(frames, s, precision=hi)
    power = re * re + im * im                                      # (B, T, F)
    fb = jnp.asarray(
        _mel_filterbank(n_freqs, 0.0, sr / 2.0, n_mels, sr), jnp.float32)
    mel = jnp.matmul(power, fb, precision=hi)                      # (B, T, M)
    db = 10.0 * jnp.log10(jnp.maximum(mel, 1e-10))
    return jnp.transpose(db, (0, 2, 1))                            # (B, M, T)


if __name__ == "__main__":
    sr = 16000
    n_fft = 256
    hop_length = 128
    n_mels = 128
    B, L = 2, 2048

    key = jax.random.PRNGKey(0)
    x = jax.random.normal(key, (B, L), jnp.float32)

    forward = make_audio2logmel(sr, n_fft, hop_length, n_mels=n_mels)
    out = forward(x)
    out = jax.block_until_ready(out)

    n_frames = 1 + L // hop_length
    assert out.shape == (B, n_mels, n_frames), out.shape

    ref = _reference_logmel(x, sr, n_fft, hop_length, n_mels)
    max_err = float(jnp.max(jnp.abs(out - ref)))
    assert jnp.allclose(out, ref, atol=1e-1, rtol=1e-3), max_err

    print("KERNEL_OK")
</pallas_src>

<mosaic_0001>
module attributes {stable_mosaic.version = 11 : i64} {
  func.func @_logmel_kernel(%arg0: i32, %arg1: memref<1x18x128xf32, #tpu.memory_space<vmem>>, %arg2: memref<256x512xf32, #tpu.memory_space<vmem>>, %arg3: memref<256x128xf32, #tpu.memory_space<vmem>>, %arg4: memref<1x17x128xf32, #tpu.memory_space<vmem>>) attributes {dimension_semantics = [#tpu.dimension_semantics<parallel>], iteration_bounds = array<i64: 2>, scalar_prefetch = 0 : i64, scratch_operands = 0 : i64, tpu.core_type = #tpu.core_type<tc>, window_params = [{transform_indices = @transform_0, window_bounds = array<i64: 1, 18, 128>}, {pipeline_mode = #tpu.pipeline_mode<synchronous>, transform_indices = @transform_1, window_bounds = array<i64: 256, 512>}, {pipeline_mode = #tpu.pipeline_mode<synchronous>, transform_indices = @transform_2, window_bounds = array<i64: 256, 128>}, {transform_indices = @transform_3, window_bounds = array<i64: 1, 17, 128>}]} {
    %cst = arith.constant 0.000000e+00 : f32
    %0 = vector.broadcast %cst : f32 to vector<17x512xf32>
    %c0 = arith.constant 0 : index
    %c0_0 = arith.constant 0 : index
    %c0_1 = arith.constant 0 : index
    %1 = vector.load %arg1[%c0, %c0_0, %c0_1] : memref<1x18x128xf32, #tpu.memory_space<vmem>>, vector<1x17x128xf32>
    %2 = vector.shape_cast %1 : vector<1x17x128xf32> to vector<17x128xf32>
    %c0_2 = arith.constant 0 : index
    %c0_3 = arith.constant 0 : index
    %3 = vector.load %arg2[%c0_2, %c0_3] : memref<256x512xf32, #tpu.memory_space<vmem>>, vector<128x512xf32>
    %cst_4 = arith.constant dense<0.000000e+00> : vector<17x512xf32>
    %4 = tpu.matmul %2, %3, %cst_4 {dimension_numbers = #tpu.dot_dimension_numbers<[1], [0], [0], [1], [0, 0, 1, 1], [], []>} : vector<17x128xf32>, vector<128x512xf32>, vector<17x512xf32> -> vector<17x512xf32>
    %5 = arith.addf %0, %4 : vector<17x512xf32>
    %c0_5 = arith.constant 0 : index
    %c1 = arith.constant 1 : index
    %c0_6 = arith.constant 0 : index
    %6 = vector.load %arg1[%c0_5, %c1, %c0_6] : memref<1x18x128xf32, #tpu.memory_space<vmem>>, vector<1x17x128xf32>
    %7 = vector.shape_cast %6 : vector<1x17x128xf32> to vector<17x128xf32>
    %c128 = arith.constant 128 : index
    %c0_7 = arith.constant 0 : index
    %8 = vector.load %arg2[%c128, %c0_7] : memref<256x512xf32, #tpu.memory_space<vmem>>, vector<128x512xf32>
    %cst_8 = arith.constant dense<0.000000e+00> : vector<17x512xf32>
    %9 = tpu.matmul %7, %8, %cst_8 {dimension_numbers = #tpu.dot_dimension_numbers<[1], [0], [0], [1], [0, 0, 1, 1], [], []>} : vector<17x128xf32>, vector<128x512xf32>, vector<17x512xf32> -> vector<17x512xf32>
    %10 = arith.addf %5, %9 : vector<17x512xf32>
    %11 = vector.extract_strided_slice %10 {offsets = [0, 0], sizes = [17, 256], strides = [1, 1]} : vector<17x512xf32> to vector<17x256xf32>
    %12 = vector.extract_strided_slice %10 {offsets = [0, 256], sizes = [17, 256], strides = [1, 1]} : vector<17x512xf32> to vector<17x256xf32>
    %13 = arith.mulf %11, %11 : vector<17x256xf32>
    %14 = arith.mulf %12, %12 : vector<17x256xf32>
    %15 = arith.addf %13, %14 : vector<17x256xf32>
    %c0_9 = arith.constant 0 : index
    %c0_10 = arith.constant 0 : index
    %16 = vector.load %arg3[%c0_9, %c0_10] : memref<256x128xf32, #tpu.memory_space<vmem>>, vector<256x128xf32>
    %cst_11 = arith.constant dense<0.000000e+00> : vector<17x128xf32>
    %17 = tpu.matmul %15, %16, %cst_11 {dimension_numbers = #tpu.dot_dimension_numbers<[1], [0], [0], [1], [0, 0, 1, 1], [], []>} : vector<17x256xf32>, vector<256x128xf32>, vector<17x128xf32> -> vector<17x128xf32>
    %cst_12 = arith.constant 1.000000e-10 : f32
    %18 = vector.broadcast %cst_12 : f32 to vector<17x128xf32>
    %19 = arith.maximumf %17, %18 : vector<17x128xf32>
    %20 = math.log %19 : vector<17x128xf32>
    %cst_13 = arith.constant 0.434294492 : f32
    %21 = vector.broadcast %cst_13 : f32 to vector<17x128xf32>
    %22 = arith.mulf %20, %21 : vector<17x128xf32>
    %cst_14 = arith.constant 1.000000e+01 : f32
    %23 = vector.broadcast %cst_14 : f32 to vector<17x128xf32>
    %24 = arith.mulf %23, %22 : vector<17x128xf32>
    %c0_15 = arith.constant 0 : index
    %c0_16 = arith.constant 0 : index
    %c0_17 = arith.constant 0 : index
    %25 = vector.load %arg4[%c0_15, %c0_16, %c0_17] : memref<1x17x128xf32, #tpu.memory_space<vmem>>, vector<1x17x128xf32>
    %26 = vector.shape_cast %25 : vector<1x17x128xf32> to vector<17x128xf32>
    %27 = vector.shape_cast %24 : vector<17x128xf32> to vector<1x17x128xf32>
    tpu.vector_store %arg4[%c0_15, %c0_16, %c0_17], %27 {strides = array<i32>} : memref<1x17x128xf32, #tpu.memory_space<vmem>>, vector<1x17x128xf32>,
    return
  }
  func.func @transform_0(%arg0: i32) -> (i32, i32, i32) {
    %c0_i32 = arith.constant 0 : i32
    %c0_i32_0 = arith.constant 0 : i32
    %c0_i32_1 = arith.constant 0 : i32
    return %arg0, %c0_i32, %c0_i32_0 : i32, i32, i32
  }
  func.func @transform_1(%arg0: i32) -> (i32, i32) {
    %c0_i32 = arith.constant 0 : i32
    %c0_i32_0 = arith.constant 0 : i32
    %c0_i32_1 = arith.constant 0 : i32
    return %c0_i32, %c0_i32_0 : i32, i32
  }
  func.func @transform_2(%arg0: i32) -> (i32, i32) {
    %c0_i32 = arith.constant 0 : i32
    %c0_i32_0 = arith.constant 0 : i32
    %c0_i32_1 = arith.constant 0 : i32
    return %c0_i32, %c0_i32_0 : i32, i32
  }
  func.func @transform_3(%arg0: i32) -> (i32, i32, i32) {
    %c0_i32 = arith.constant 0 : i32
    %c0_i32_0 = arith.constant 0 : i32
    %c0_i32_1 = arith.constant 0 : i32
    return %arg0, %c0_i32, %c0_i32_0 : i32, i32, i32
  }
}

</mosaic_0001>

<llo_original>
// kernel: tpu_custom_call.1
$region0: #{tpu_custom_call.1}
  #allocation0 [shape = 'u32[]', space=smem, size = 0x4, offset = 0x4, fixed_abs, tag = 'smem constant byte address 0x4 - core index']
  #allocation1 [shape = 'u32[144,128]{1,0:T(1,128)}', space=vmem, size = 0x12000, scoped, tag = 'internal scratch']
  %s0 = inlined_call_operand.vmem [shape: f32[2,18,128], index: 0, kind: input, shape index: {}]
  %s1 = inlined_call_operand.hbm [shape: f32[256,512], index: 1, kind: input, shape index: {}]
  %s2 = inlined_call_operand.hbm [shape: f32[256,128], index: 2, kind: input, shape index: {}]
  %s3 = inlined_call_operand.vmem [shape: f32[2,17,128], index: 3, kind: output, shape index: {}]
  %s4 = sld [smem:[#allocation0]]
  $region53: #{tpu_custom_call.1} parent=0
    _
  %s6 = ssub.s32 1, %s4
  %s7 = scalar_select 0, %s6, %s4
  $region1: #{tpu_custom_call.1} parent=0
    #allocation2 [shape = 'u8[524288]{0}', space=vmem, size = 0x80000, scoped, tag = 'input window, operand 1, single buffered']
    #allocation3 [shape = 's32[2]{0}', space=sflag, size = 0x8, scoped, tag = 'scoped memory for tpu_custom_call.1']
    #allocation4 [shape = 'u8[131072]{0}', space=vmem, size = 0x20000, scoped, tag = 'input window, operand 2, single buffered']
    #allocation5 [shape = 's32[1]{0}', space=sflag, size = 0x4, scoped, tag = 'scoped memory for tpu_custom_call.1']
    %8 = vsyncpa [#allocation3], 0
    %9 = vsyncpa [#allocation5], 0
    loop: start=0, step=1, limit=4
    $region2: #{tpu_custom_call.1} parent=1 // loop_pre_header
      _
    $region3: #{tpu_custom_call.1} parent=1 // loop_header
      %s11 = sphi 0, %s15
      %p12 = scmp.ge.s32.totalorder %s11, 4
      %s21 = sphi 0, %s23
      %s24 = sphi 0, %s21
      %s25 = sphi 0, %s24
      %s41 = sphi 0, %s25
      %s45 = sphi 0, %s45
      %s47 = sphi 0, %s45
      %s48 = sphi 0, %s47
      %s62 = sphi 0, %s48
      %s66 = sphi 0, %s66
      %s68 = sphi 0, %s66
      %s69 = sphi 0, %s68
      %s83 = sphi 0, %s69
      %s89 = sphi 0, %s91
      %s92 = sphi 0, %s89
      %s93 = sphi 0, %s92
      %s109 = sphi 0, %s93
    $region4: #{tpu_custom_call.1} parent=1 // loop_header_branch
      %14 = sbr.rel (%p12) target = $region8
    $region5: #{tpu_custom_call.1} parent=1 // loop_body
      %s16 = ssub.s32 %s11, 1
      %s17 = ssub.s32 %s11, 2
      %s18 = sadd.s32 %s11, 1
      %s19 = ssub.s32 %s11, %s18
      %p20 = scmp.eq.s32.totalorder %s19, 0
      %s22 = sadd.s32 %s21, 1
      %s23 = scalar_select %p20, %s21, %s22
      %p26 = pneg %p20
      %p27 = scmp.eq.s32.totalorder %s11, 1
      %p28 = por %p26, %p27
      %p29 = scmp.ne.s32.totalorder %s21, %s24
      %p30 = scmp.eq.s32.totalorder %s11, 0
      %p31 = por %p29, %p30
      %p32 = scmp.ne.s32.totalorder %s21, %s24
      %p33 = scmp.eq.s32.totalorder %s16, 1
      %p34 = por %p32, %p33
      %p35 = scmp.ne.s32.totalorder %s24, %s25
      %p36 = scmp.eq.s32.totalorder %s16, 0
      %p37 = por %p35, %p36
      %p38 = scmp.ne.s32.totalorder %s24, %s25
      %p39 = scmp.eq.s32.totalorder %s17, 1
      %p40 = por %p38, %p39
      %p42 = scmp.ne.s32.totalorder %s25, %s41
      %p43 = scmp.eq.s32.totalorder %s17, 0
      %p44 = por %p42, %p43
      %s46 = sadd.s32 %s45, 1
      %p49 = scmp.eq.s32.totalorder %s11, 1
      %p50 = scmp.ne.s32.totalorder %s45, %s47
      %p51 = scmp.eq.s32.totalorder %s11, 0
      %p52 = por %p50, %p51
      %p53 = scmp.ne.s32.totalorder %s45, %s47
      %p54 = scmp.eq.s32.totalorder %s16, 1
      %p55 = por %p53, %p54
      %p56 = scmp.ne.s32.totalorder %s47, %s48
      %p57 = scmp.eq.s32.totalorder %s16, 0
      %p58 = por %p56, %p57
      %p59 = scmp.ne.s32.totalorder %s47, %s48
      %p60 = scmp.eq.s32.totalorder %s17, 1
      %p61 = por %p59, %p60
      %p63 = scmp.ne.s32.totalorder %s48, %s62
      %p64 = scmp.eq.s32.totalorder %s17, 0
      %p65 = por %p63, %p64
      %s67 = sadd.s32 %s66, 1
      %p70 = scmp.eq.s32.totalorder %s11, 1
      %p71 = scmp.ne.s32.totalorder %s66, %s68
      %p72 = scmp.eq.s32.totalorder %s11, 0
      %p73 = por %p71, %p72
      %p74 = scmp.ne.s32.totalorder %s66, %s68
      %p75 = scmp.eq.s32.totalorder %s16, 1
      %p76 = por %p74, %p75
      %p77 = scmp.ne.s32.totalorder %s68, %s69
      %p78 = scmp.eq.s32.totalorder %s16, 0
      %p79 = por %p77, %p78
      %p80 = scmp.ne.s32.totalorder %s68, %s69
      %p81 = scmp.eq.s32.totalorder %s17, 1
      %p82 = por %p80, %p81
      %p84 = scmp.ne.s32.totalorder %s69, %s83
      %p85 = scmp.eq.s32.totalorder %s17, 0
      %p86 = por %p84, %p85
      %s87 = ssub.s32 %s11, %s18
      %p88 = scmp.eq.s32.totalorder %s87, 0
      %s90 = sadd.s32 %s89, 1
      %s91 = scalar_select %p88, %s89, %s90
      %p94 = pneg %p88
      %p95 = scmp.eq.s32.totalorder %s11, 1
      %p96 = por %p94, %p95
      %p97 = scmp.ne.s32.totalorder %s89, %s92
      %p98 = scmp.eq.s32.totalorder %s11, 0
      %p99 = por %p97, %p98
      %p100 = scmp.ne.s32.totalorder %s89, %s92
      %p101 = scmp.eq.s32.totalorder %s16, 1
      %p102 = por %p100, %p101
      %p103 = scmp.ne.s32.totalorder %s92, %s93
      %p104 = scmp.eq.s32.totalorder %s16, 0
      %p105 = por %p103, %p104
      %p106 = scmp.ne.s32.totalorder %s92, %s93
      %p107 = scmp.eq.s32.totalorder %s17, 1
      %p108 = por %p106, %p107
      %p110 = scmp.ne.s32.totalorder %s93, %s109
      %p111 = scmp.eq.s32.totalorder %s17, 0
      %p112 = por %p110, %p111
      %p113 = scmp.le.s32.totalorder 1, %s11
      %p114 = scmp.lt.s32.totalorder %s11, 3
      %p115 = pnand %p113, %p114
      %p116 = pneg %p115
      // Predicated region
      $region9: #{tpu_custom_call.1} parent=5 // pred_check
        _
      $region10: #{tpu_custom_call.1} parent=5 // pred_check_branch
        %118 = sbr.rel (%p115) target = $region12
      $region11: #{tpu_custom_call.1} parent=5 // pred_region
        %s119 = ssub.s32 %s11, 1
        // Predicated region
        $region13: #{tpu_custom_call.1} parent=11 // pred_check
          %p120 = pneg %p58
        $region14: #{tpu_custom_call.1} parent=11 // pred_check_branch
          %122 = sbr.rel (%p120) target = $region16
        $region15: #{tpu_custom_call.1} parent=11 // pred_region
          %s124 = ssub.s32 16384, 16384
          %125 = vsyncadd [#allocation3], %s124
          %s126 = sshll.u32 [#allocation2], 4
          %s127 = int_to_ptr.vmem [resolvable:$true] %s126
          %132 = dma.hbm_to_vmem [thread:$0]  %s1, 16384, %s127, [#allocation3], 512, 512, 32
        $region16: #{tpu_custom_call.1} parent=11 // pred_fallthru
          _
        // Predicated region
        $region17: #{tpu_custom_call.1} parent=11 // pred_check
          %p133 = pneg %p79
        $region18: #{tpu_custom_call.1} parent=11 // pred_check_branch
          %135 = sbr.rel (%p133) target = $region20
        $region19: #{tpu_custom_call.1} parent=11 // pred_region
          %s137 = ssub.s32 4096, 4096
          %138 = vsyncadd [#allocation5], %s137
          %s139 = sshll.u32 [#allocation4], 4
          %s140 = int_to_ptr.vmem [resolvable:$true] %s139
          %145 = dma.hbm_to_vmem [thread:$0]  %s2, 4096, %s140, [#allocation5], 128, 128, 8
        $region20: #{tpu_custom_call.1} parent=11 // pred_fallthru
          _
      $region12: #{tpu_custom_call.1} parent=5 // pred_fallthru
        _
      %p146 = scmp.lt.s32.totalorder %s11, 2
      // Predicated region
      $region21: #{tpu_custom_call.1} parent=5 // pred_check
        %p147 = pneg %p146
      $region22: #{tpu_custom_call.1} parent=5 // pred_check_branch
        %149 = sbr.rel (%p147) target = $region24
      $region23: #{tpu_custom_call.1} parent=5 // pred_region
        // Predicated region
        $region25: #{tpu_custom_call.1} parent=23 // pred_check
          %p150 = pneg %p31
        $region26: #{tpu_custom_call.1} parent=23 // pred_check_branch
          %152 = sbr.rel (%p150) target = $region28
        $region27: #{tpu_custom_call.1} parent=23 // pred_region
          %p153 = scmp.lt.s32.totalorder %s11, 1
          %s154 = scalar_select %p153, %s11, 1
          %s155 = smul.addr %s154, 3
          %s156 = smul.addr %s155, 8
          %s157 = scalar_lea.vmem %s0, %s156
        $region28: #{tpu_custom_call.1} parent=23 // pred_fallthru
          _
      $region24: #{tpu_custom_call.1} parent=5 // pred_fallthru
        _
      %p158 = scmp.le.s32.totalorder 1, %s11
      %p159 = scmp.lt.s32.totalorder %s11, 3
      %p160 = pnand %p158, %p159
      %p161 = pneg %p160
      // Predicated region
      $region29: #{tpu_custom_call.1} parent=5 // pred_check
        _
      $region30: #{tpu_custom_call.1} parent=5 // pred_check_branch
        %163 = sbr.rel (%p160) target = $region32
      $region31: #{tpu_custom_call.1} parent=5 // pred_region
        %s164 = ssub.s32 %s11, 1
        // Predicated region
        $region33: #{tpu_custom_call.1} parent=31 // pred_check
          %p165 = pneg %p58
        $region34: #{tpu_custom_call.1} parent=31 // pred_check_branch
          %167 = sbr.rel (%p165) target = $region36
        $region35: #{tpu_custom_call.1} parent=31 // pred_region
          %168 = dma.done [#allocation3], 16384
        $region36: #{tpu_custom_call.1} parent=31 // pred_fallthru
          _
        // Predicated region
        $region37: #{tpu_custom_call.1} parent=31 // pred_check
          %p169 = pneg %p79
        $region38: #{tpu_custom_call.1} parent=31 // pred_check_branch
          %171 = sbr.rel (%p169) target = $region40
        $region39: #{tpu_custom_call.1} parent=31 // pred_region
          %172 = dma.done [#allocation5], 4096
        $region40: #{tpu_custom_call.1} parent=31 // pred_fallthru
          _
        %p173 = scmp.lt.s32.totalorder %s16, 1
        %s174 = scalar_select %p173, %s16, 1
        %s175 = smul.addr %s174, 3
        %s176 = smul.addr %s175, 8
        %s177 = scalar_lea.vmem %s0, %s176
        %p178 = pneg %p37
        %p179 = pneg %p34
        %p180 = pneg %p58
        %p181 = pneg %p55
        %p182 = pneg %p79
        %p183 = pneg %p76
        %p184 = pneg %p105
        %p185 = pneg %p102
        %p186 = scmp.lt.s32.totalorder %s16, 1
        %s187 = scalar_select %p186, %s16, 1
        %s188 = smul.addr %s187, 3
        %s189 = smul.addr %s188, 8
        %s190 = scalar_lea.vmem %s3, %s189
        %p191 = scmp.lt.s32.totalorder %s16, 1
        %s192 = scalar_select %p191, %s16, 1
        %s193 = smul.addr %s192, 3
        %s194 = smul.addr %s193, 8
        %s195 = scalar_lea.vmem %s0, %s194
        %p196 = scmp.lt.s32.totalorder %s16, 1
        %s197 = scalar_select %p196, %s16, 1
        %s198 = smul.addr %s197, 3
        %s199 = smul.addr %s198, 8
        %s200 = scalar_lea.vmem %s3, %s199
        %v201 = vld [vmem:[%s195] sm:$0xff]
        %v202 = vld [vmem:[%s195 + $0x8] sm:$0xff]
        %v203 = vld [vmem:[%s195 + $0x10] sm:$0x1]
        %v204 = vld [vmem:[#allocation2] sm:$0xff]
        %v205 = vld [vmem:[#allocation2 + $0x8] sm:$0xff]
        %v206 = vld [vmem:[#allocation2 + $0x10] sm:$0xff]
        %v207 = vld [vmem:[#allocation2 + $0x18] sm:$0xff]
        %v208 = vld [vmem:[#allocation2 + $0x20] sm:$0xff]
        %v209 = vld [vmem:[#allocation2 + $0x28] sm:$0xff]
        %v210 = vld [vmem:[#allocation2 + $0x30] sm:$0xff]
        %v211 = vld [vmem:[#allocation2 + $0x38] sm:$0xff]
        %v212 = vld [vmem:[#allocation2 + $0x40] sm:$0xff]
        %v213 = vld [vmem:[#allocation2 + $0x48] sm:$0xff]
        %v214 = vld [vmem:[#allocation2 + $0x50] sm:$0xff]
        %v215 = vld [vmem:[#allocation2 + $0x58] sm:$0xff]
        %v216 = vld [vmem:[#allocation2 + $0x60] sm:$0xff]
        %v217 = vld [vmem:[#allocation2 + $0x68] sm:$0xff]
        %v218 = vld [vmem:[#allocation2 + $0x70] sm:$0xff]
        %v219 = vld [vmem:[#allocation2 + $0x78] sm:$0xff]
        %v220 = vld [vmem:[#allocation2 + $0x80] sm:$0xff]
        %v221 = vld [vmem:[#allocation2 + $0x88] sm:$0xff]
        %v222 = vld [vmem:[#allocation2 + $0x90] sm:$0xff]
        %v223 = vld [vmem:[#allocation2 + $0x98] sm:$0xff]
        %v224 = vld [vmem:[#allocation2 + $0xa0] sm:$0xff]
        %v225 = vld [vmem:[#allocation2 + $0xa8] sm:$0xff]
        %v226 = vld [vmem:[#allocation2 + $0xb0] sm:$0xff]
        %v227 = vld [vmem:[#allocation2 + $0xb8] sm:$0xff]
        %v228 = vld [vmem:[#allocation2 + $0xc0] sm:$0xff]
        %v229 = vld [vmem:[#allocation2 + $0xc8] sm:$0xff]
        %v230 = vld [vmem:[#allocation2 + $0xd0] sm:$0xff]
        %v231 = vld [vmem:[#allocation2 + $0xd8] sm:$0xff]
        %v232 = vld [vmem:[#allocation2 + $0xe0] sm:$0xff]
        %v233 = vld [vmem:[#allocation2 + $0xe8] sm:$0xff]
        %v234 = vld [vmem:[#allocation2 + $0xf0] sm:$0xff]
        %v235 = vld [vmem:[#allocation2 + $0xf8] sm:$0xff]
        %v236 = vld [vmem:[#allocation2 + $0x100] sm:$0xff]
        %v237 = vld [vmem:[#allocation2 + $0x108] sm:$0xff]
        %v238 = vld [vmem:[#allocation2 + $0x110] sm:$0xff]
        %v239 = vld [vmem:[#allocation2 + $0x118] sm:$0xff]
        %v240 = vld [vmem:[#allocation2 + $0x120] sm:$0xff]
        %v241 = vld [vmem:[#allocation2 + $0x128] sm:$0xff]
        %v242 = vld [vmem:[#allocation2 + $0x130] sm:$0xff]
        %v243 = vld [vmem:[#allocation2 + $0x138] sm:$0xff]
        %v244 = vld [vmem:[#allocation2 + $0x140] sm:$0xff]
        %v245 = vld [vmem:[#allocation2 + $0x148] sm:$0xff]
        %v246 = vld [vmem:[#allocation2 + $0x150] sm:$0xff]
        %v247 = vld [vmem:[#allocation2 + $0x158] sm:$0xff]
        %v248 = vld [vmem:[#allocation2 + $0x160] sm:$0xff]
        %v249 = vld [vmem:[#allocation2 + $0x168] sm:$0xff]
        %v250 = vld [vmem:[#allocation2 + $0x170] sm:$0xff]
        %v251 = vld [vmem:[#allocation2 + $0x178] sm:$0xff]
        %v252 = vld [vmem:[#allocation2 + $0x180] sm:$0xff]
        %v253 = vld [vmem:[#allocation2 + $0x188] sm:$0xff]
        %v254 = vld [vmem:[#allocation2 + $0x190] sm:$0xff]
        %v255 = vld [vmem:[#allocation2 + $0x198] sm:$0xff]
        %v256 = vld [vmem:[#allocation2 + $0x1a0] sm:$0xff]
        %v257 = vld [vmem:[#allocation2 + $0x1a8] sm:$0xff]
        %v258 = vld [vmem:[#allocation2 + $0x1b0] sm:$0xff]
        %v259 = vld [vmem:[#allocation2 + $0x1b8] sm:$0xff]
        %v260 = vld [vmem:[#allocation2 + $0x1c0] sm:$0xff]
        %v261 = vld [vmem:[#allocation2 + $0x1c8] sm:$0xff]
        %v262 = vld [vmem:[#allocation2 + $0x1d0] sm:$0xff]
        %v263 = vld [vmem:[#allocation2 + $0x1d8] sm:$0xff]
        %v264 = vld [vmem:[#allocation2 + $0x1e0] sm:$0xff]
        %v265 = vld [vmem:[#allocation2 + $0x1e8] sm:$0xff]
        %v266 = vld [vmem:[#allocation2 + $0x1f0] sm:$0xff]
        %v267 = vld [vmem:[#allocation2 + $0x1f8] sm:$0xff]
        %v268 = vld [vmem:[%s195 + $0x1] sm:$0xff]
        %v269 = vld [vmem:[%s195 + $0x9] sm:$0xff]
        %v270 = vld [vmem:[%s195 + $0x11] sm:$0x1]
        %v271 = vld [vmem:[#allocation2 + $0x200] sm:$0xff]
        %v272 = vld [vmem:[#allocation2 + $0x208] sm:$0xff]
        %v273 = vld [vmem:[#allocation2 + $0x210] sm:$0xff]
        %v274 = vld [vmem:[#allocation2 + $0x218] sm:$0xff]
        %v275 = vld [vmem:[#allocation2 + $0x220] sm:$0xff]
        %v276 = vld [vmem:[#allocation2 + $0x228] sm:$0xff]
        %v277 = vld [vmem:[#allocation2 + $0x230] sm:$0xff]
        %v278 = vld [vmem:[#allocation2 + $0x238] sm:$0xff]
        %v279 = vld [vmem:[#allocation2 + $0x240] sm:$0xff]
        %v280 = vld [vmem:[#allocation2 + $0x248] sm:$0xff]
        %v281 = vld [vmem:[#allocation2 + $0x250] sm:$0xff]
        %v282 = vld [vmem:[#allocation2 + $0x258] sm:$0xff]
        %v283 = vld [vmem:[#allocation2 + $0x260] sm:$0xff]
        %v284 = vld [vmem:[#allocation2 + $0x268] sm:$0xff]
        %v285 = vld [vmem:[#allocation2 + $0x270] sm:$0xff]
        %v286 = vld [vmem:[#allocation2 + $0x278] sm:$0xff]
        %v287 = vld [vmem:[#allocation2 + $0x280] sm:$0xff]
        %v288 = vld [vmem:[#allocation2 + $0x288] sm:$0xff]
        %v289 = vld [vmem:[#allocation2 + $0x290] sm:$0xff]
        %v290 = vld [vmem:[#allocation2 + $0x298] sm:$0xff]
        %v291 = vld [vmem:[#allocation2 + $0x2a0] sm:$0xff]
        %v292 = vld [vmem:[#allocation2 + $0x2a8] sm:$0xff]
        %v293 = vld [vmem:[#allocation2 + $0x2b0] sm:$0xff]
        %v294 = vld [vmem:[#allocation2 + $0x2b8] sm:$0xff]
        %v295 = vld [vmem:[#allocation2 + $0x2c0] sm:$0xff]
        %v296 = vld [vmem:[#allocation2 + $0x2c8] sm:$0xff]
        %v297 = vld [vmem:[#allocation2 + $0x2d0] sm:$0xff]
        %v298 = vld [vmem:[#allocation2 + $0x2d8] sm:$0xff]
        %v299 = vld [vmem:[#allocation2 + $0x2e0] sm:$0xff]
        %v300 = vld [vmem:[#allocation2 + $0x2e8] sm:$0xff]
        %v301 = vld [vmem:[#allocation2 + $0x2f0] sm:$0xff]
        %v302 = vld [vmem:[#allocation2 + $0x2f8] sm:$0xff]
        %v303 = vld [vmem:[#allocation2 + $0x300] sm:$0xff]
        %v304 = vld [vmem:[#allocation2 + $0x308] sm:$0xff]
        %v305 = vld [vmem:[#allocation2 + $0x310] sm:$0xff]
        %v306 = vld [vmem:[#allocation2 + $0x318] sm:$0xff]
        %v307 = vld [vmem:[#allocation2 + $0x320] sm:$0xff]
        %v308 = vld [vmem:[#allocation2 + $0x328] sm:$0xff]
        %v309 = vld [vmem:[#allocation2 + $0x330] sm:$0xff]
        %v310 = vld [vmem:[#allocation2 + $0x338] sm:$0xff]
        %v311 = vld [vmem:[#allocation2 + $0x340] sm:$0xff]
        %v312 = vld [vmem:[#allocation2 + $0x348] sm:$0xff]
        %v313 = vld [vmem:[#allocation2 + $0x350] sm:$0xff]
        %v314 = vld [vmem:[#allocation2 + $0x358] sm:$0xff]
        %v315 = vld [vmem:[#allocation2 + $0x360] sm:$0xff]
        %v316 = vld [vmem:[#allocation2 + $0x368] sm:$0xff]
        %v317 = vld [vmem:[#allocation2 + $0x370] sm:$0xff]
        %v318 = vld [vmem:[#allocation2 + $0x378] sm:$0xff]
        %v319 = vld [vmem:[#allocation2 + $0x380] sm:$0xff]
        %v320 = vld [vmem:[#allocation2 + $0x388] sm:$0xff]
        %v321 = vld [vmem:[#allocation2 + $0x390] sm:$0xff]
        %v322 = vld [vmem:[#allocation2 + $0x398] sm:$0xff]
        %v323 = vld [vmem:[#allocation2 + $0x3a0] sm:$0xff]
        %v324 = vld [vmem:[#allocation2 + $0x3a8] sm:$0xff]
        %v325 = vld [vmem:[#allocation2 + $0x3b0] sm:$0xff]
        %v326 = vld [vmem:[#allocation2 + $0x3b8] sm:$0xff]
        %v327 = vld [vmem:[#allocation2 + $0x3c0] sm:$0xff]
        %v328 = vld [vmem:[#allocation2 + $0x3c8] sm:$0xff]
        %v329 = vld [vmem:[#allocation2 + $0x3d0] sm:$0xff]
        %v330 = vld [vmem:[#allocation2 + $0x3d8] sm:$0xff]
        %v331 = vld [vmem:[#allocation2 + $0x3e0] sm:$0xff]
        %v332 = vld [vmem:[#allocation2 + $0x3e8] sm:$0xff]
        %v333 = vld [vmem:[#allocation2 + $0x3f0] sm:$0xff]
        %v334 = vld [vmem:[#allocation2 + $0x3f8] sm:$0xff]
        %335 = vmatprep.subr.mxu0 %v272
        %336 = vmatpush1.msra.mxu0 %v271
        %337 = vmatprep.subr.mxu0 %v276
        %338 = vmatpush1.msra.mxu0 %v275
        %339 = vmatprep.subr.mxu0 %v280
        %340 = vmatpush1.msra.mxu0 %v279
        %341 = vmatprep.subr.mxu0 %v284
        %342 = vmatpush1.msra.mxu0 %v283
        %343 = vmatprep.subr.mxu0 %v288
        %344 = vmatpush1.msra.mxu0 %v287
        %345 = vmatprep.subr.mxu0 %v292
        %346 = vmatpush1.msra.mxu0 %v291
        %347 = vmatprep.subr.mxu0 %v296
        %348 = vmatpush1.msra.mxu0 %v295
        %349 = vmatprep.subr.mxu0 %v300
        %350 = vmatpush1.msra.mxu0 %v299
        %351 = vmatprep.subr.mxu0 %v304
        %352 = vmatpush1.msra.mxu0 %v303
        %353 = vmatprep.subr.mxu0 %v308
        %354 = vmatpush1.msra.mxu0 %v307
        %355 = vmatprep.subr.mxu0 %v312
        %356 = vmatpush1.msra.mxu0 %v311
        %357 = vmatprep.subr.mxu0 %v316
        %358 = vmatpush1.msra.mxu0 %v315
        %359 = vmatprep.subr.mxu0 %v320
        %360 = vmatpush1.msra.mxu0 %v319
        %361 = vmatprep.subr.mxu0 %v324
        %362 = vmatpush1.msra.mxu0 %v323
        %363 = vmatprep.subr.mxu0 %v328
        %364 = vmatpush1.msra.mxu0 %v327
        %365 = vmatprep.subr.mxu0 %v332
        %366 = vmatpush1.msra.mxu0 %v331
        %367 = vmatprep.subr.mxu0 0.0
        %368 = vmatpush1.msra.mxu0 0.0
        %369 = vmatprep.subr.mxu0 0.0
        %370 = vmatpush1.msra.mxu0 0.0
        %371 = vmatprep.subr.mxu0 0.0
        %372 = vmatpush1.msra.mxu0 0.0
        %373 = vmatprep.subr.mxu0 0.0
        %374 = vmatpush1.msra.mxu0 0.0
        %375 = vmatprep.subr.mxu0 0.0
        %376 = vmatpush1.msra.mxu0 0.0
        %377 = vmatprep.subr.mxu0 0.0
        %378 = vmatpush1.msra.mxu0 0.0
        %379 = vmatprep.subr.mxu0 0.0
        %380 = vmatpush1.msra.mxu0 0.0
        %381 = vmatprep.subr.mxu0 0.0
        %382 = vmatpush1.msra.mxu0 0.0
        %383 = vmatprep.subr.mxu0 0.0
        %384 = vmatpush1.msra.mxu0 0.0
        %385 = vmatprep.subr.mxu0 0.0
        %386 = vmatpush1.msra.mxu0 0.0
        %387 = vmatprep.subr.mxu0 0.0
        %388 = vmatpush1.msra.mxu0 0.0
        %389 = vmatprep.subr.mxu0 0.0
        %390 = vmatpush1.msra.mxu0 0.0
        %391 = vmatprep.subr.mxu0 0.0
        %392 = vmatpush1.msra.mxu0 0.0
        %393 = vmatprep.subr.mxu0 0.0
        %394 = vmatpush1.msra.mxu0 0.0
        %395 = vmatprep.subr.mxu0 0.0
        %396 = vmatpush1.msra.mxu0 0.0
        %397 = vmatprep.subr.mxu0 0.0
        %398 = vmatpush1.msra.mxu0 0.0
        %399 = vmatprep.mubr.f32.mxu0 0.0
        %400 = vmatmul.mubr.f32.gmra.mrb[0].mxu0 %v268
        %v401 = vpop.f32.mrb[0].mxu0
        %v402 = vadd.f32 0.0, %v401
        %v403 = vpop.f32.mrb[0].mxu0
        %v404 = vadd.f32 0.0, %v403
        %405 = vmatprep.mubr.f32.mxu0 0.0
        %406 = vmatmul.mubr.f32.gmra.mrb[0].mxu0 %v269
        %v407 = vpop.f32.mrb[0].mxu0
        %v408 = vadd.f32 0.0, %v407
        %v409 = vpop.f32.mrb[0].mxu0
        %v410 = vadd.f32 0.0, %v409
        %411 = vmatprep.mubr.f32.mxu0 0.0
        %412 = vmatmul.mubr.f32.gmra.mrb[0].mxu0 %v270
        %v413 = vpop.f32.mrb[0].mxu0
        %v414 = vadd.f32 0.0, %v413
        %v415 = vpop.f32.mrb[0].mxu0
        %v416 = vadd.f32 0.0, %v415
        %417 = vdwg.mxu0
        %418 = vmatprep.subr.mxu0 %v274
        %419 = vmatpush1.msra.mxu0 %v273
        %420 = vmatprep.subr.mxu0 %v278
        %421 = vmatpush1.msra.mxu0 %v277
        %422 = vmatprep.subr.mxu0 %v282
        %423 = vmatpush1.msra.mxu0 %v281
        %424 = vmatprep.subr.mxu0 %v286
        %425 = vmatpush1.msra.mxu0 %v285
        %426 = vmatprep.subr.mxu0 %v290
        %427 = vmatpush1.msra.mxu0 %v289
        %428 = vmatprep.subr.mxu0 %v294
        %429 = vmatpush1.msra.mxu0 %v293
        %430 = vmatprep.subr.mxu0 %v298
        %431 = vmatpush1.msra.mxu0 %v297
        %432 = vmatprep.subr.mxu0 %v302
        %433 = vmatpush1.msra.mxu0 %v301
        %434 = vmatprep.subr.mxu0 %v306
        %435 = vmatpush1.msra.mxu0 %v305
        %436 = vmatprep.subr.mxu0 %v310
        %437 = vmatpush1.msra.mxu0 %v309
        %438 = vmatprep.subr.mxu0 %v314
        %439 = vmatpush1.msra.mxu0 %v313
        %440 = vmatprep.subr.mxu0 %v318
        %441 = vmatpush1.msra.mxu0 %v317
        %442 = vmatprep.subr.mxu0 %v322
        %443 = vmatpush1.msra.mxu0 %v321
        %444 = vmatprep.subr.mxu0 %v326
        %445 = vmatpush1.msra.mxu0 %v325
        %446 = vmatprep.subr.mxu0 %v330
        %447 = vmatpush1.msra.mxu0 %v329
        %448 = vmatprep.subr.mxu0 %v334
        %449 = vmatpush1.msra.mxu0 %v333
        %450 = vmatprep.subr.mxu0 0.0
        %451 = vmatpush1.msra.mxu0 0.0
        %452 = vmatprep.subr.mxu0 0.0
        %453 = vmatpush1.msra.mxu0 0.0
        %454 = vmatprep.subr.mxu0 0.0
        %455 = vmatpush1.msra.mxu0 0.0
        %456 = vmatprep.subr.mxu0 0.0
        %457 = vmatpush1.msra.mxu0 0.0
        %458 = vmatprep.subr.mxu0 0.0
        %459 = vmatpush1.msra.mxu0 0.0
        %460 = vmatprep.subr.mxu0 0.0
        %461 = vmatpush1.msra.mxu0 0.0
        %462 = vmatprep.subr.mxu0 0.0
        %463 = vmatpush1.msra.mxu0 0.0
        %464 = vmatprep.subr.mxu0 0.0
        %465 = vmatpush1.msra.mxu0 0.0
        %466 = vmatprep.subr.mxu0 0.0
        %467 = vmatpush1.msra.mxu0 0.0
        %468 = vmatprep.subr.mxu0 0.0
        %469 = vmatpush1.msra.mxu0 0.0
        %470 = vmatprep.subr.mxu0 0.0
        %471 = vmatpush1.msra.mxu0 0.0
        %472 = vmatprep.subr.mxu0 0.0
        %473 = vmatpush1.msra.mxu0 0.0
        %474 = vmatprep.subr.mxu0 0.0
        %475 = vmatpush1.msra.mxu0 0.0
        %476 = vmatprep.subr.mxu0 0.0
        %477 = vmatpush1.msra.mxu0 0.0
        %478 = vmatprep.subr.mxu0 0.0
        %479 = vmatpush1.msra.mxu0 0.0
        %480 = vmatprep.subr.mxu0 0.0
        %481 = vmatpush1.msra.mxu0 0.0
        %482 = vmatprep.mubr.f32.mxu0 0.0
        %483 = vmatmul.mubr.f32.gmra.mrb[0].mxu0 %v268
        %v484 = vpop.f32.mrb[0].mxu0
        %v485 = vadd.f32 0.0, %v484
        %v486 = vpop.f32.mrb[0].mxu0
        %v487 = vadd.f32 0.0, %v486
        %488 = vmatprep.mubr.f32.mxu0 0.0
        %489 = vmatmul.mubr.f32.gmra.mrb[0].mxu0 %v269
        %v490 = vpop.f32.mrb[0].mxu0
        %v491 = vadd.f32 0.0, %v490
        %v492 = vpop.f32.mrb[0].mxu0
        %v493 = vadd.f32 0.0, %v492
        %494 = vmatprep.mubr.f32.mxu0 0.0
        %495 = vmatmul.mubr.f32.gmra.mrb[0].mxu0 %v270
        %v496 = vpop.f32.mrb[0].mxu0
        %v497 = vadd.f32 0.0, %v496
        %v498 = vpop.f32.mrb[0].mxu0
        %v499 = vadd.f32 0.0, %v498
        %500 = vdwg.mxu0
        %501 = vmatprep.subr.mxu0 %v205
        %502 = vmatpush1.msra.mxu0 %v204
        %503 = vmatprep.subr.mxu0 %v209
        %504 = vmatpush1.msra.mxu0 %v208
        %505 = vmatprep.subr.mxu0 %v213
        %506 = vmatpush1.msra.mxu0 %v212
        %507 = vmatprep.subr.mxu0 %v217
        %508 = vmatpush1.msra.mxu0 %v216
        %509 = vmatprep.subr.mxu0 %v221
        %510 = vmatpush1.msra.mxu0 %v220
        %511 = vmatprep.subr.mxu0 %v225
        %512 = vmatpush1.msra.mxu0 %v224
        %513 = vmatprep.subr.mxu0 %v229
        %514 = vmatpush1.msra.mxu0 %v228
        %515 = vmatprep.subr.mxu0 %v233
        %516 = vmatpush1.msra.mxu0 %v232
        %517 = vmatprep.subr.mxu0 %v237
        %518 = vmatpush1.msra.mxu0 %v236
        %519 = vmatprep.subr.mxu0 %v241
        %520 = vmatpush1.msra.mxu0 %v240
        %521 = vmatprep.subr.mxu0 %v245
        %522 = vmatpush1.msra.mxu0 %v244
        %523 = vmatprep.subr.mxu0 %v249
        %524 = vmatpush1.msra.mxu0 %v248
        %525 = vmatprep.subr.mxu0 %v253
        %526 = vmatpush1.msra.mxu0 %v252
        %527 = vmatprep.subr.mxu0 %v257
        %528 = vmatpush1.msra.mxu0 %v256
        %529 = vmatprep.subr.mxu0 %v261
        %530 = vmatpush1.msra.mxu0 %v260
        %531 = vmatprep.subr.mxu0 %v265
        %532 = vmatpush1.msra.mxu0 %v264
        %533 = vmatprep.subr.mxu0 0.0
        %534 = vmatpush1.msra.mxu0 0.0
        %535 = vmatprep.subr.mxu0 0.0
        %536 = vmatpush1.msra.mxu0 0.0
        %537 = vmatprep.subr.mxu0 0.0
        %538 = vmatpush1.msra.mxu0 0.0
        %539 = vmatprep.subr.mxu0 0.0
        %540 = vmatpush1.msra.mxu0 0.0
        %541 = vmatprep.subr.mxu0 0.0
        %542 = vmatpush1.msra.mxu0 0.0
        %543 = vmatprep.subr.mxu0 0.0
        %544 = vmatpush1.msra.mxu0 0.0
        %545 = vmatprep.subr.mxu0 0.0
        %546 = vmatpush1.msra.mxu0 0.0
        %547 = vmatprep.subr.mxu0 0.0
        %548 = vmatpush1.msra.mxu0 0.0
        %549 = vmatprep.subr.mxu0 0.0
        %550 = vmatpush1.msra.mxu0 0.0
        %551 = vmatprep.subr.mxu0 0.0
        %552 = vmatpush1.msra.mxu0 0.0
        %553 = vmatprep.subr.mxu0 0.0
        %554 = vmatpush1.msra.mxu0 0.0
        %555 = vmatprep.subr.mxu0 0.0
        %556 = vmatpush1.msra.mxu0 0.0
        %557 = vmatprep.subr.mxu0 0.0
        %558 = vmatpush1.msra.mxu0 0.0
        %559 = vmatprep.subr.mxu0 0.0
        %560 = vmatpush1.msra.mxu0 0.0
        %561 = vmatprep.subr.mxu0 0.0
        %562 = vmatpush1.msra.mxu0 0.0
        %563 = vmatprep.subr.mxu0 0.0
        %564 = vmatpush1.msra.mxu0 0.0
        %565 = vmatprep.mubr.f32.mxu0 0.0
        %566 = vmatmul.mubr.f32.gmra.mrb[0].mxu0 %v201
        %v567 = vpop.f32.mrb[0].mxu0
        %v568 = vadd.f32 %v402, %v567
        %v569 = vpop.f32.mrb[0].mxu0
        %v570 = vadd.f32 %v404, %v569
        %571 = vmatprep.mubr.f32.mxu0 0.0
        %572 = vmatmul.mubr.f32.gmra.mrb[0].mxu0 %v202
        %v573 = vpop.f32.mrb[0].mxu0
        %v574 = vadd.f32 %v408, %v573
        %v575 = vpop.f32.mrb[0].mxu0
        %v576 = vadd.f32 %v410, %v575
        %577 = vmatprep.mubr.f32.mxu0 0.0
        %578 = vmatmul.mubr.f32.gmra.mrb[0].mxu0 %v203
        %v579 = vpop.f32.mrb[0].mxu0
        %v580 = vadd.f32 %v414, %v579
        %v581 = vpop.f32.mrb[0].mxu0
        %v582 = vadd.f32 %v416, %v581
        %583 = vdwg.mxu0
        %584 = vmatprep.subr.mxu0 %v207
        %585 = vmatpush1.msra.mxu0 %v206
        %586 = vmatprep.subr.mxu0 %v211
        %587 = vmatpush1.msra.mxu0 %v210
        %588 = vmatprep.subr.mxu0 %v215
        %589 = vmatpush1.msra.mxu0 %v214
        %590 = vmatprep.subr.mxu0 %v219
        %591 = vmatpush1.msra.mxu0 %v218
        %592 = vmatprep.subr.mxu0 %v223
        %593 = vmatpush1.msra.mxu0 %v222
        %594 = vmatprep.subr.mxu0 %v227
        %595 = vmatpush1.msra.mxu0 %v226
        %596 = vmatprep.subr.mxu0 %v231
        %597 = vmatpush1.msra.mxu0 %v230
        %598 = vmatprep.subr.mxu0 %v235
        %599 = vmatpush1.msra.mxu0 %v234
        %600 = vmatprep.subr.mxu0 %v239
        %601 = vmatpush1.msra.mxu0 %v238
        %602 = vmatprep.subr.mxu0 %v243
        %603 = vmatpush1.msra.mxu0 %v242
        %604 = vmatprep.subr.mxu0 %v247
        %605 = vmatpush1.msra.mxu0 %v246
        %606 = vmatprep.subr.mxu0 %v251
        %607 = vmatpush1.msra.mxu0 %v250
        %608 = vmatprep.subr.mxu0 %v255
        %609 = vmatpush1.msra.mxu0 %v254
        %610 = vmatprep.subr.mxu0 %v259
        %611 = vmatpush1.msra.mxu0 %v258
        %612 = vmatprep.subr.mxu0 %v263
        %613 = vmatpush1.msra.mxu0 %v262
        %614 = vmatprep.subr.mxu0 %v267
        %615 = vmatpush1.msra.mxu0 %v266
        %616 = vmatprep.subr.mxu0 0.0
        %617 = vmatpush1.msra.mxu0 0.0
        %618 = vmatprep.subr.mxu0 0.0
        %619 = vmatpush1.msra.mxu0 0.0
        %620 = vmatprep.subr.mxu0 0.0
        %621 = vmatpush1.msra.mxu0 0.0
        %622 = vmatprep.subr.mxu0 0.0
        %623 = vmatpush1.msra.mxu0 0.0
        %624 = vmatprep.subr.mxu0 0.0
        %625 = vmatpush1.msra.mxu0 0.0
        %626 = vmatprep.subr.mxu0 0.0
        %627 = vmatpush1.msra.mxu0 0.0
        %628 = vmatprep.subr.mxu0 0.0
        %629 = vmatpush1.msra.mxu0 0.0
        %630 = vmatprep.subr.mxu0 0.0
        %631 = vmatpush1.msra.mxu0 0.0
        %632 = vmatprep.subr.mxu0 0.0
        %633 = vmatpush1.msra.mxu0 0.0
        %634 = vmatprep.subr.mxu0 0.0
        %635 = vmatpush1.msra.mxu0 0.0
        %636 = vmatprep.subr.mxu0 0.0
        %637 = vmatpush1.msra.mxu0 0.0
        %638 = vmatprep.subr.mxu0 0.0
        %639 = vmatpush1.msra.mxu0 0.0
        %640 = vmatprep.subr.mxu0 0.0
        %641 = vmatpush1.msra.mxu0 0.0
        %642 = vmatprep.subr.mxu0 0.0
        %643 = vmatpush1.msra.mxu0 0.0
        %644 = vmatprep.subr.mxu0 0.0
        %645 = vmatpush1.msra.mxu0 0.0
        %646 = vmatprep.subr.mxu0 0.0
        %647 = vmatpush1.msra.mxu0 0.0
        %648 = vmatprep.mubr.f32.mxu0 0.0
        %649 = vmatmul.mubr.f32.gmra.mrb[0].mxu0 %v201
        %v650 = vpop.f32.mrb[0].mxu0
        %v651 = vadd.f32 %v485, %v650
        %v652 = vpop.f32.mrb[0].mxu0
        %v653 = vadd.f32 %v487, %v652
        %654 = vmatprep.mubr.f32.mxu0 0.0
        %655 = vmatmul.mubr.f32.gmra.mrb[0].mxu0 %v202
        %v656 = vpop.f32.mrb[0].mxu0
        %v657 = vadd.f32 %v491, %v656
        %v658 = vpop.f32.mrb[0].mxu0
        %v659 = vadd.f32 %v493, %v658
        %660 = vmatprep.mubr.f32.mxu0 0.0
        %661 = vmatmul.mubr.f32.gmra.mrb[0].mxu0 %v203
        %v662 = vpop.f32.mrb[0].mxu0
        %v663 = vadd.f32 %v497, %v662
        %v664 = vpop.f32.mrb[0].mxu0
        %v665 = vadd.f32 %v499, %v664
        %666 = vdwg.mxu0
        %v667 = vmul.f32 %v568, %v568
        %v668 = vmul.f32 %v570, %v570
        %v669 = vmul.f32 %v574, %v574
        %v670 = vmul.f32 %v576, %v576
        %v671 = vmul.f32 %v580, %v580
        %v672 = vmul.f32 %v582, %v582
        %v673 = vmul.f32 %v651, %v651
        %v674 = vmul.f32 %v653, %v653
        %v675 = vmul.f32 %v657, %v657
        %v676 = vmul.f32 %v659, %v659
        %v677 = vmul.f32 %v663, %v663
        %v678 = vmul.f32 %v665, %v665
        %v679 = vadd.f32 %v667, %v673
        %v680 = vadd.f32 %v668, %v674
        %v681 = vadd.f32 %v669, %v675
        %v682 = vadd.f32 %v670, %v676
        %v683 = vadd.f32 %v671, %v677
        %v684 = vadd.f32 %v672, %v678
        %v685 = vld [vmem:[#allocation4] sm:$0xff]
        %v686 = vld [vmem:[#allocation4 + $0x8] sm:$0xff]
        %v687 = vld [vmem:[#allocation4 + $0x10] sm:$0xff]
        %v688 = vld [vmem:[#allocation4 + $0x18] sm:$0xff]
        %v689 = vld [vmem:[#allocation4 + $0x20] sm:$0xff]
        %v690 = vld [vmem:[#allocation4 + $0x28] sm:$0xff]
        %v691 = vld [vmem:[#allocation4 + $0x30] sm:$0xff]
        %v692 = vld [vmem:[#allocation4 + $0x38] sm:$0xff]
        %v693 = vld [vmem:[#allocation4 + $0x40] sm:$0xff]
        %v694 = vld [vmem:[#allocation4 + $0x48] sm:$0xff]
        %v695 = vld [vmem:[#allocation4 + $0x50] sm:$0xff]
        %v696 = vld [vmem:[#allocation4 + $0x58] sm:$0xff]
        %v697 = vld [vmem:[#allocation4 + $0x60] sm:$0xff]
        %v698 = vld [vmem:[#allocation4 + $0x68] sm:$0xff]
        %v699 = vld [vmem:[#allocation4 + $0x70] sm:$0xff]
        %v700 = vld [vmem:[#allocation4 + $0x78] sm:$0xff]
        %v701 = vld [vmem:[#allocation4 + $0x80] sm:$0xff]
        %v702 = vld [vmem:[#allocation4 + $0x88] sm:$0xff]
        %v703 = vld [vmem:[#allocation4 + $0x90] sm:$0xff]
        %v704 = vld [vmem:[#allocation4 + $0x98] sm:$0xff]
        %v705 = vld [vmem:[#allocation4 + $0xa0] sm:$0xff]
        %v706 = vld [vmem:[#allocation4 + $0xa8] sm:$0xff]
        %v707 = vld [vmem:[#allocation4 + $0xb0] sm:$0xff]
        %v708 = vld [vmem:[#allocation4 + $0xb8] sm:$0xff]
        %v709 = vld [vmem:[#allocation4 + $0xc0] sm:$0xff]
        %v710 = vld [vmem:[#allocation4 + $0xc8] sm:$0xff]
        %v711 = vld [vmem:[#allocation4 + $0xd0] sm:$0xff]
        %v712 = vld [vmem:[#allocation4 + $0xd8] sm:$0xff]
        %v713 = vld [vmem:[#allocation4 + $0xe0] sm:$0xff]
        %v714 = vld [vmem:[#allocation4 + $0xe8] sm:$0xff]
        %v715 = vld [vmem:[#allocation4 + $0xf0] sm:$0xff]
        %v716 = vld [vmem:[#allocation4 + $0xf8] sm:$0xff]
        %717 = vmatprep.subr.mxu0 0.0
        %718 = vmatpush1.msra.mxu0 %v685
        %719 = vmatprep.subr.mxu0 0.0
        %720 = vmatpush1.msra.mxu0 %v686
        %721 = vmatprep.subr.mxu0 0.0
        %722 = vmatpush1.msra.mxu0 %v687
        %723 = vmatprep.subr.mxu0 0.0
        %724 = vmatpush1.msra.mxu0 %v688
        %725 = vmatprep.subr.mxu0 0.0
        %726 = vmatpush1.msra.mxu0 %v689
        %727 = vmatprep.subr.mxu0 0.0
        %728 = vmatpush1.msra.mxu0 %v690
        %729 = vmatprep.subr.mxu0 0.0
        %730 = vmatpush1.msra.mxu0 %v691
        %731 = vmatprep.subr.mxu0 0.0
        %732 = vmatpush1.msra.mxu0 %v692
        %733 = vmatprep.subr.mxu0 0.0
        %734 = vmatpush1.msra.mxu0 %v693
        %735 = vmatprep.subr.mxu0 0.0
        %736 = vmatpush1.msra.mxu0 %v694
        %737 = vmatprep.subr.mxu0 0.0
        %738 = vmatpush1.msra.mxu0 %v695
        %739 = vmatprep.subr.mxu0 0.0
        %740 = vmatpush1.msra.mxu0 %v696
        %741 = vmatprep.subr.mxu0 0.0
        %742 = vmatpush1.msra.mxu0 %v697
        %743 = vmatprep.subr.mxu0 0.0
        %744 = vmatpush1.msra.mxu0 %v698
        %745 = vmatprep.subr.mxu0 0.0
        %746 = vmatpush1.msra.mxu0 %v699
        %747 = vmatprep.subr.mxu0 0.0
        %748 = vmatpush1.msra.mxu0 %v700
        %749 = vmatprep.subr.mxu0 0.0
        %750 = vmatpush1.msra.mxu0 %v701
        %751 = vmatprep.subr.mxu0 0.0
        %752 = vmatpush1.msra.mxu0 %v702
        %753 = vmatprep.subr.mxu0 0.0
        %754 = vmatpush1.msra.mxu0 %v703
        %755 = vmatprep.subr.mxu0 0.0
        %756 = vmatpush1.msra.mxu0 %v704
        %757 = vmatprep.subr.mxu0 0.0
        %758 = vmatpush1.msra.mxu0 %v705
        %759 = vmatprep.subr.mxu0 0.0
        %760 = vmatpush1.msra.mxu0 %v706
        %761 = vmatprep.subr.mxu0 0.0
        %762 = vmatpush1.msra.mxu0 %v707
        %763 = vmatprep.subr.mxu0 0.0
        %764 = vmatpush1.msra.mxu0 %v708
        %765 = vmatprep.subr.mxu0 0.0
        %766 = vmatpush1.msra.mxu0 %v709
        %767 = vmatprep.subr.mxu0 0.0
        %768 = vmatpush1.msra.mxu0 %v710
        %769 = vmatprep.subr.mxu0 0.0
        %770 = vmatpush1.msra.mxu0 %v711
        %771 = vmatprep.subr.mxu0 0.0
        %772 = vmatpush1.msra.mxu0 %v712
        %773 = vmatprep.subr.mxu0 0.0
        %774 = vmatpush1.msra.mxu0 %v713
        %775 = vmatprep.subr.mxu0 0.0
        %776 = vmatpush1.msra.mxu0 %v714
        %777 = vmatprep.subr.mxu0 0.0
        %778 = vmatpush1.msra.mxu0 %v715
        %779 = vmatprep.subr.mxu0 0.0
        %780 = vmatpush1.msra.mxu0 %v716
        %781 = vmatprep.mubr.f32.mxu0 %v680
        %782 = vmatmul.mubr.f32.gmra.mrb[0].mxu0 %v679
        %v783 = vpop.f32.mrb[0].mxu0
        %v784 = vadd.f32 0.0, %v783
        %v785 = vpop.f32.mrb[0].mxu0
        %786 = vmatprep.mubr.f32.mxu0 %v682
        %787 = vmatmul.mubr.f32.gmra.mrb[0].mxu0 %v681
        %v788 = vpop.f32.mrb[0].mxu0
        %v789 = vadd.f32 0.0, %v788
        %v790 = vpop.f32.mrb[0].mxu0
        %791 = vmatprep.mubr.f32.mxu0 %v684
        %792 = vmatmul.mubr.f32.gmra.mrb[0].mxu0 %v683
        %v793 = vpop.f32.mrb[0].mxu0
        %v794 = vadd.f32 0.0, %v793
        %v795 = vpop.f32.mrb[0].mxu0
        %796 = vdwg.mxu0
        %v797 = vmax.f32 %v784, 1e-10
        %v798 = vmax.f32 %v789, 1e-10
        %v799 = vmax.f32 %v794, 1e-10
        %v800 = vlog2.pop %v797
        %v801 = vmul.f32 %v800, 0.6931472
        %v802 = vlog2.pop %v798
        %v803 = vmul.f32 %v802, 0.6931472
        %v804 = vlog2.pop %v799
        %v805 = vmul.f32 %v804, 0.6931472
        %v806 = vmul.f32 %v801, 0.4342945
        %v807 = vmul.f32 %v803, 0.4342945
        %v808 = vmul.f32 %v805, 0.4342945
        %v809 = vmul.f32 %v806, 10.0
        %v810 = vmul.f32 %v807, 10.0
        %v811 = vmul.f32 %v808, 10.0
        %812 = vst [vmem:[%s200] sm:$0xff] %v809
        %813 = vst [vmem:[%s200 + $0x8] sm:$0xff] %v810
        %814 = vst [vmem:[%s200 + $0x10] sm:$0x1] %v811
        %p815 = scmp.lt.s32.totalorder %s16, 1
        %s816 = scalar_select %p815, %s16, 1
        %s817 = smul.addr %s816, 3
        %s818 = smul.addr %s817, 8
        %s819 = scalar_lea.vmem %s3, %s818
        // Predicated region
        $region41: #{tpu_custom_call.1} parent=31 // pred_check
          %p820 = pneg %p102
        $region42: #{tpu_custom_call.1} parent=31 // pred_check_branch
          %822 = sbr.rel (%p820) target = $region44
        $region43: #{tpu_custom_call.1} parent=31 // pred_region
          _
        $region44: #{tpu_custom_call.1} parent=31 // pred_fallthru
          _
      $region32: #{tpu_custom_call.1} parent=5 // pred_fallthru
        _
      %p823 = scmp.le.s32.totalorder 2, %s11
      // Predicated region
      $region45: #{tpu_custom_call.1} parent=5 // pred_check
        %p824 = pneg %p823
      $region46: #{tpu_custom_call.1} parent=5 // pred_check_branch
        %826 = sbr.rel (%p824) target = $region48
      $region47: #{tpu_custom_call.1} parent=5 // pred_region
        %s827 = ssub.s32 %s11, 2
        // Predicated region
        $region49: #{tpu_custom_call.1} parent=47 // pred_check
          %p828 = pneg %p108
        $region50: #{tpu_custom_call.1} parent=47 // pred_check_branch
          %830 = sbr.rel (%p828) target = $region52
        $region51: #{tpu_custom_call.1} parent=47 // pred_region
          %p831 = scmp.lt.s32.totalorder %s17, 1
          %s832 = scalar_select %p831, %s17, 1
          %s833 = smul.addr %s832, 3
          %s834 = smul.addr %s833, 8
          %s835 = scalar_lea.vmem %s3, %s834
        $region52: #{tpu_custom_call.1} parent=47 // pred_fallthru
          _
      $region48: #{tpu_custom_call.1} parent=5 // pred_fallthru
        _
    $region6: #{tpu_custom_call.1} parent=1 // loop_footer
      %s15 = sadd.s32 1, %s11
    $region7: #{tpu_custom_call.1} parent=1 // loop_footer_branch
      %10 = sbr.rel target = $region3
    $region8: #{tpu_custom_call.1} parent=1 // loop_exit
      _
    %836 = vsyncpa [#allocation3], 1
    %s837 = scalar_lea.sflag [#allocation3], 1
    %838 = vsyncpa %s837, 1
    %839 = vsyncpa [#allocation5], 1

</llo_original>
